<compile_context>
chip_gen: v5e
topology: v5e:2x2
jax: 0.10.0
libtpu: 0.0.40
codegen_flags: <defaults>
</compile_context>

<pallas_src>
import jax
import jax.numpy as jnp
from jax.experimental import pallas as pl
from jax.experimental.pallas import tpu as pltpu


def actnorm_kernel(x_ref, z_ref, s_ref, t_ref):
    n = x_ref.shape[0]
    inv_n = jnp.float32(1.0 / n)
    inv_nm1 = jnp.float32(1.0 / (n - 1))          # unbiased (ddof=1), like torch.std

    x = x_ref[...]                                 # (N, TILE_D), native dtype
    # Batch mean per feature, accumulated in f32 (no separate full f32 copy of x).
    mean = jnp.sum(x, axis=0, keepdims=True, dtype=jnp.float32) * inv_n      # (1, TILE_D)
    centered = x.astype(jnp.float32) - mean                                   # (N, TILE_D) f32
    var = jnp.sum(centered * centered, axis=0, keepdims=True) * inv_nm1       # (1, TILE_D)

    es = jax.lax.rsqrt(var)                        # exp(s) = 1/std
    s = -0.5 * jnp.log(var)                        # = -log(std)
    t = -es * mean                                 # = -mean(x * exp(s))  (es const over batch)
    z = es * centered                              # = x * exp(s) + t

    z_ref[...] = z.astype(z_ref.dtype)
    s_ref[...] = s.astype(s_ref.dtype)
    t_ref[...] = t.astype(t_ref.dtype)


def _choose_tile_d(n, d, itemsize=4, budget_bytes=4 * 1024 * 1024):
    """Largest multiple-of-128 divisor of d whose (n, tile) block fits the budget."""
    if d % 128 != 0:
        return d  # block == full array dim satisfies the lane constraint
    max_tile = max(128, (budget_bytes // max(n * itemsize, 1)) // 128 * 128)
    tile = min(d, max_tile)
    tile = max(128, (tile // 128) * 128)
    while tile > 128 and d % tile != 0:
        tile -= 128
    if d % tile != 0:
        tile = d
    return tile


def actnorm_forward(x, *, tile_d=None):
    """Returns (z, log_det, s, t) for the first (data-dependent-init) forward call."""
    n, d = x.shape
    assert n >= 2, "unbiased std (ddof=1) requires batch size >= 2"
    if tile_d is None:
        tile_d = _choose_tile_d(n, d, itemsize=jnp.dtype(x.dtype).itemsize)
    assert d % tile_d == 0

    z, s, t = pl.pallas_call(
        actnorm_kernel,
        out_shape=(
            jax.ShapeDtypeStruct((n, d), x.dtype),      # z
            jax.ShapeDtypeStruct((1, d), jnp.float32),  # s
            jax.ShapeDtypeStruct((1, d), jnp.float32),  # t
        ),
        grid=(d // tile_d,),
        in_specs=[pl.BlockSpec((n, tile_d), lambda j: (0, j))],
        out_specs=(
            pl.BlockSpec((n, tile_d), lambda j: (0, j)),
            pl.BlockSpec((1, tile_d), lambda j: (0, j)),
            pl.BlockSpec((1, tile_d), lambda j: (0, j)),
        ),
        compiler_params=pltpu.CompilerParams(
            dimension_semantics=("parallel",),          # per-feature tiles are independent
            vmem_limit_bytes=32 * 1024 * 1024,
        ),
    )(x)

    # log_det = sum(s, dim=1): tiny (1, D) reduction, done in plain JAX.
    log_det = jnp.sum(s, axis=1)                        # shape (1,)
    return z, log_det, s, t


def actnorm_reference(x):
    """Pure-JAX reference mirroring the PyTorch module."""
    n = x.shape[0]
    mean = jnp.mean(x, axis=0, keepdims=True)
    std = jnp.sqrt(jnp.sum((x - mean) ** 2, axis=0, keepdims=True) / (n - 1))
    s = -jnp.log(std)
    t = -jnp.mean(x * jnp.exp(s), axis=0, keepdims=True)
    z = x * jnp.exp(s) + t
    log_det = jnp.sum(s, axis=1)
    return z, log_det, s, t


if __name__ == "__main__":
    key = jax.random.PRNGKey(0)
    N, D = 16, 128   # small, but lane-dense last dim (multiple of 128)
    x = jax.random.normal(key, (N, D), dtype=jnp.float32) * 2.5 + 1.0

    z, log_det, s, t = actnorm_forward(x)
    jax.block_until_ready((z, log_det, s, t))

    z_ref, ld_ref, s_ref, t_ref = actnorm_reference(x)
    assert z.shape == (N, D) and log_det.shape == (1,)
    assert jnp.allclose(z, z_ref, atol=1e-5, rtol=1e-5)
    assert jnp.allclose(log_det, ld_ref, atol=1e-5, rtol=1e-5)
    assert jnp.allclose(s, s_ref, atol=1e-5, rtol=1e-5)
    assert jnp.allclose(t, t_ref, atol=1e-5, rtol=1e-5)

    print("KERNEL_OK")
</pallas_src>

<mosaic_0001>
module attributes {stable_mosaic.version = 11 : i64} {
  func.func @actnorm_kernel(%arg0: i32, %arg1: memref<16x128xf32, #tpu.memory_space<vmem>>, %arg2: memref<16x128xf32, #tpu.memory_space<vmem>>, %arg3: memref<1x128xf32, #tpu.memory_space<vmem>>, %arg4: memref<1x128xf32, #tpu.memory_space<vmem>>) attributes {dimension_semantics = [#tpu.dimension_semantics<parallel>], iteration_bounds = array<i64: 1>, scalar_prefetch = 0 : i64, scratch_operands = 0 : i64, tpu.core_type = #tpu.core_type<tc>, window_params = [{transform_indices = @transform_0, window_bounds = array<i64: 16, 128>}, {transform_indices = @transform_1, window_bounds = array<i64: 16, 128>}, {transform_indices = @transform_2, window_bounds = array<i64: 1, 128>}, {transform_indices = @transform_3, window_bounds = array<i64: 1, 128>}]} {
    %c0 = arith.constant 0 : index
    %c0_0 = arith.constant 0 : index
    %0 = vector.load %arg1[%c0, %c0_0] : memref<16x128xf32, #tpu.memory_space<vmem>>, vector<16x128xf32>
    %cst = arith.constant dense<0.000000e+00> : vector<128xf32>
    %1 = vector.multi_reduction <add>, %0, %cst [0] : vector<16x128xf32> to vector<128xf32>
    %2 = vector.shape_cast %1 : vector<128xf32> to vector<1x128xf32>
    %cst_1 = arith.constant 6.250000e-02 : f32
    %3 = vector.broadcast %cst_1 : f32 to vector<1x128xf32>
    %4 = arith.mulf %2, %3 : vector<1x128xf32>
    %5 = vector.broadcast %4 : vector<1x128xf32> to vector<16x128xf32>
    %6 = arith.subf %0, %5 : vector<16x128xf32>
    %7 = arith.mulf %6, %6 : vector<16x128xf32>
    %cst_2 = arith.constant dense<0.000000e+00> : vector<128xf32>
    %8 = vector.multi_reduction <add>, %7, %cst_2 [0] : vector<16x128xf32> to vector<128xf32>
    %9 = vector.shape_cast %8 : vector<128xf32> to vector<1x128xf32>
    %cst_3 = arith.constant 0.0666666701 : f32
    %10 = vector.broadcast %cst_3 : f32 to vector<1x128xf32>
    %11 = arith.mulf %9, %10 : vector<1x128xf32>
    %12 = math.rsqrt %11 : vector<1x128xf32>
    %13 = math.log %11 : vector<1x128xf32>
    %cst_4 = arith.constant -5.000000e-01 : f32
    %14 = vector.broadcast %cst_4 : f32 to vector<1x128xf32>
    %15 = arith.mulf %14, %13 : vector<1x128xf32>
    %cst_5 = arith.constant 0.000000e+00 : f32
    %16 = vector.broadcast %cst_5 : f32 to vector<1x128xf32>
    %17 = arith.subf %16, %12 : vector<1x128xf32>
    %18 = arith.mulf %17, %4 : vector<1x128xf32>
    %19 = vector.broadcast %12 : vector<1x128xf32> to vector<16x128xf32>
    %20 = arith.mulf %19, %6 : vector<16x128xf32>
    %c0_6 = arith.constant 0 : index
    %c0_7 = arith.constant 0 : index
    %21 = vector.load %arg2[%c0_6, %c0_7] : memref<16x128xf32, #tpu.memory_space<vmem>>, vector<16x128xf32>
    tpu.vector_store %arg2[%c0_6, %c0_7], %20 {strides = array<i32>} : memref<16x128xf32, #tpu.memory_space<vmem>>, vector<16x128xf32>,
    %c0_8 = arith.constant 0 : index
    %c0_9 = arith.constant 0 : index
    %22 = vector.load %arg3[%c0_8, %c0_9] : memref<1x128xf32, #tpu.memory_space<vmem>>, vector<1x128xf32>
    tpu.vector_store %arg3[%c0_8, %c0_9], %15 {strides = array<i32>} : memref<1x128xf32, #tpu.memory_space<vmem>>, vector<1x128xf32>,
    %c0_10 = arith.constant 0 : index
    %c0_11 = arith.constant 0 : index
    %23 = vector.load %arg4[%c0_10, %c0_11] : memref<1x128xf32, #tpu.memory_space<vmem>>, vector<1x128xf32>
    tpu.vector_store %arg4[%c0_10, %c0_11], %18 {strides = array<i32>} : memref<1x128xf32, #tpu.memory_space<vmem>>, vector<1x128xf32>,
    return
  }
  func.func @transform_0(%arg0: i32) -> (i32, i32) {
    %c0_i32 = arith.constant 0 : i32
    %c0_i32_0 = arith.constant 0 : i32
    return %c0_i32, %arg0 : i32, i32
  }
  func.func @transform_1(%arg0: i32) -> (i32, i32) {
    %c0_i32 = arith.constant 0 : i32
    %c0_i32_0 = arith.constant 0 : i32
    return %c0_i32, %arg0 : i32, i32
  }
  func.func @transform_2(%arg0: i32) -> (i32, i32) {
    %c0_i32 = arith.constant 0 : i32
    %c0_i32_0 = arith.constant 0 : i32
    return %c0_i32, %arg0 : i32, i32
  }
  func.func @transform_3(%arg0: i32) -> (i32, i32) {
    %c0_i32 = arith.constant 0 : i32
    %c0_i32_0 = arith.constant 0 : i32
    return %c0_i32, %arg0 : i32, i32
  }
}

</mosaic_0001>

<llo_original>
// kernel: tpu_custom_call.1
$region0: #{tpu_custom_call.1}
  #allocation0 [shape = 'u32[]', space=smem, size = 0x4, offset = 0x4, fixed_abs, tag = 'smem constant byte address 0x4 - core index']
  #allocation1 [shape = 'u32[72,128]{1,0:T(1,128)}', space=vmem, size = 0x9000, scoped, tag = 'internal scratch']
  %s0 = inlined_call_operand.hbm [shape: f32[16,128], index: 0, kind: input, shape index: {}]
  %s1 = inlined_call_operand.hbm [shape: f32[16,128], index: 1, kind: output, shape index: {0}]
  %s2 = inlined_call_operand.hbm [shape: f32[1,128], index: 2, kind: output, shape index: {1}]
  %s3 = inlined_call_operand.hbm [shape: f32[1,128], index: 3, kind: output, shape index: {2}]
  %4 = xla_tuple %s1, %s2, %s3
  %s5 = sld [smem:[#allocation0]]
  $region34: #{tpu_custom_call.1} parent=0
    _
  %s7 = ssub.s32 1, %s5
  %s8 = scalar_select 0, %s7, %s5
  $region1: #{tpu_custom_call.1} parent=0
    #allocation2 [shape = 'u8[8192]{0}', space=vmem, size = 0x2000, scoped, tag = 'input window, operand 0, single buffered']
    #allocation3 [shape = 's32[1]{0}', space=sflag, size = 0x4, scoped, tag = 'scoped memory for tpu_custom_call.1']
    #allocation4 [shape = 's32[1]{0}', space=sflag, size = 0x4, scoped, tag = 'scoped memory for tpu_custom_call.1']
    #allocation5 [shape = 'u8[8192]{0}', space=vmem, size = 0x2000, scoped, tag = 'output window, operand 0, single buffered']
    #allocation6 [shape = 'u8[512]{0}', space=vmem, size = 0x400, scoped, tag = 'output window, operand 1, single buffered']
    #allocation7 [shape = 's32[1]{0}', space=sflag, size = 0x4, scoped, tag = 'scoped memory for tpu_custom_call.1']
    #allocation8 [shape = 'u8[512]{0}', space=vmem, size = 0x400, scoped, tag = 'output window, operand 2, single buffered']
    %9 = vsyncpa [#allocation3], 0
    %10 = vsyncpa [#allocation4], 0
    %11 = vsyncpa [#allocation7], 0
    // Predicated region
    $region2: #{tpu_custom_call.1} parent=1 // pred_check
      _
    $region3: #{tpu_custom_call.1} parent=1 // pred_check_branch
      %13 = sbr.rel (0) target = $region5
    $region4: #{tpu_custom_call.1} parent=1 // pred_region
      %15 = vsyncadd [#allocation3], 0
      %s16 = sshll.u32 %s0, 4
      %s17 = int_to_ptr.hbm [resolvable:$true] %s16
      %s18 = sshll.u32 [#allocation2], 4
      %s19 = int_to_ptr.vmem [resolvable:$true] %s18
      %24 = dma.hbm_to_vmem [thread:$0]  %s17, 256, %s19, [#allocation3], 128, 128, 8
    $region5: #{tpu_custom_call.1} parent=1 // pred_fallthru
      _
    // Predicated region
    $region6: #{tpu_custom_call.1} parent=1 // pred_check
      _
    $region7: #{tpu_custom_call.1} parent=1 // pred_check_branch
      %26 = sbr.rel (0) target = $region9
    $region8: #{tpu_custom_call.1} parent=1 // pred_region
      %28 = dma.done [#allocation3], 256
    $region9: #{tpu_custom_call.1} parent=1 // pred_fallthru
      _
    %v29 = vld [vmem:[#allocation2] sm:$0xff]
    %v30 = vld [vmem:[#allocation2 + $0x8] sm:$0xff]
    %v31 = vadd.f32 %v29, %v30
    %v32 = vrot.slane %v31, 4
    %v33 = vadd.f32 %v31, %v32
    %v34 = vrot.slane %v33, 2
    %v35 = vadd.f32 %v33, %v34
    %v36 = vrot.slane %v35, 1
    %v37 = vadd.f32 %v35, %v36
    %v38 = vmul.f32 %v37, 0.0625
    %v39 = vsub.f32 %v29, %v38
    %v40 = vsub.f32 %v30, %v38
    %v41 = vmul.f32 %v39, %v39
    %v42 = vmul.f32 %v40, %v40
    %v43 = vadd.f32 %v41, %v42
    %v44 = vrot.slane %v43, 4
    %v45 = vadd.f32 %v43, %v44
    %v46 = vrot.slane %v45, 2
    %v47 = vadd.f32 %v45, %v46
    %v48 = vrot.slane %v47, 1
    %v49 = vadd.f32 %v47, %v48
    %v50 = vmul.f32 %v49, 0.06666667
    %v51 = vrsqrt.pop %v50
    %v52 = vmul.f32 %v51, %v50
    %v53 = vmul.f32 %v52, %v51
    %v54 = vmul.f32 0.5, %v53
    %v55 = vsub.f32 1.5, %v54
    %v56 = vmul.f32 %v51, %v55
    %vm57 = vweird.f32 %v50
    %vm58 = vweird.f32 %v51
    %vm59 = vmor %vm57, %vm58
    %v60 = vsel %vm59, %v51, %v56
    %v61 = vlog2.pop %v50
    %v62 = vmul.f32 %v61, 0.6931472
    %v63 = vmul.f32 %v62, -0.5
    %v64 = vsub.f32 0.0, %v60
    %v65 = vmul.f32 %v64, %v38
    %v66 = vmul.f32 %v60, %v39
    %v67 = vmul.f32 %v60, %v40
    %68 = vst [vmem:[#allocation5] sm:$0xff] %v66
    %69 = vst [vmem:[#allocation5 + $0x8] sm:$0xff] %v67
    %70 = vst [vmem:[#allocation6] sm:$0x1] %v63
    %71 = vst [vmem:[#allocation8] sm:$0x1] %v65
    // Predicated region
    $region10: #{tpu_custom_call.1} parent=1 // pred_check
      _
    $region11: #{tpu_custom_call.1} parent=1 // pred_check_branch
      %73 = sbr.rel (0) target = $region13
    $region12: #{tpu_custom_call.1} parent=1 // pred_region
      %75 = vsyncadd [#allocation4], 0
      %s76 = sshll.u32 [#allocation5], 4
      %s77 = int_to_ptr.vmem [resolvable:$true] %s76
      %s78 = sshll.u32 %s1, 4
      %s79 = int_to_ptr.hbm [resolvable:$true] %s78
      %84 = dma.vmem_to_hbm [thread:$0]  %s77, 256, %s79, [#allocation4], 128, 128, 8
    $region13: #{tpu_custom_call.1} parent=1 // pred_fallthru
      _
    // Predicated region
    $region14: #{tpu_custom_call.1} parent=1 // pred_check
      _
    $region15: #{tpu_custom_call.1} parent=1 // pred_check_branch
      %86 = sbr.rel (0) target = $region17
    $region16: #{tpu_custom_call.1} parent=1 // pred_region
      %88 = vsyncadd [#allocation7], 0
      %s90 = sshll.u32 [#allocation6], 4
      %s91 = int_to_ptr.vmem [resolvable:$true] %s90
      %s92 = sshll.u32 %s2, 4
      %s93 = int_to_ptr.hbm [resolvable:$true] %s92
      %95 = dma.vmem_to_hbm [thread:$0]  %s91, 16, %s93, [#allocation7]
    $region17: #{tpu_custom_call.1} parent=1 // pred_fallthru
      _
    // Predicated region
    $region18: #{tpu_custom_call.1} parent=1 // pred_check
      _
    $region19: #{tpu_custom_call.1} parent=1 // pred_check_branch
      %97 = sbr.rel (0) target = $region21
    $region20: #{tpu_custom_call.1} parent=1 // pred_region
      %99 = vsyncadd [#allocation7], 0
      %s101 = sshll.u32 [#allocation8], 4
      %s102 = int_to_ptr.vmem [resolvable:$true] %s101
      %s103 = sshll.u32 %s3, 4
      %s104 = int_to_ptr.hbm [resolvable:$true] %s103
      %106 = dma.vmem_to_hbm [thread:$0]  %s102, 16, %s104, [#allocation7]
    $region21: #{tpu_custom_call.1} parent=1 // pred_fallthru
      _
    // Predicated region
    $region22: #{tpu_custom_call.1} parent=1 // pred_check
      _
    $region23: #{tpu_custom_call.1} parent=1 // pred_check_branch
      %108 = sbr.rel (0) target = $region25
    $region24: #{tpu_custom_call.1} parent=1 // pred_region
      %110 = dma.done [#allocation4], 256
    $region25: #{tpu_custom_call.1} parent=1 // pred_fallthru
      _
    // Predicated region
    $region26: #{tpu_custom_call.1} parent=1 // pred_check
      _
    $region27: #{tpu_custom_call.1} parent=1 // pred_check_branch
      %112 = sbr.rel (0) target = $region29
    $region28: #{tpu_custom_call.1} parent=1 // pred_region
      %114 = dma.done [#allocation7], 16
    $region29: #{tpu_custom_call.1} parent=1 // pred_fallthru
      _
    // Predicated region
    $region30: #{tpu_custom_call.1} parent=1 // pred_check
      _
    $region31: #{tpu_custom_call.1} parent=1 // pred_check_branch
      %116 = sbr.rel (0) target = $region33
    $region32: #{tpu_custom_call.1} parent=1 // pred_region
      %118 = dma.done [#allocation7], 16
    $region33: #{tpu_custom_call.1} parent=1 // pred_fallthru
      _
    %119 = vsyncpa [#allocation3], 1
    %120 = vsyncpa [#allocation4], 1
    %121 = vsyncpa [#allocation7], 1

</llo_original>
